<compile_context>
chip_gen: v7x
topology: tpu7x:2x2x1
jax: 0.10.0
libtpu: 0.0.40
codegen_flags: <defaults>
</compile_context>

<pallas_src>
import functools

import jax
import jax.numpy as jnp
from jax.experimental import pallas as pl
from jax.experimental.pallas import tpu as pltpu


def _conv3x3_kernel(x_ref, w_ref, col_ref, b_ref, o_ref, *, H, W):
    # x_ref:   (NB, C, H*W)  VMEM input tile (channels-first, spatial flattened)
    # w_ref:   (9, C)        VMEM weights, already scaled by 0.1; row k = dy*3+dx
    # col_ref: (1, H*W)      VMEM int32 column index of every flat position
    # b_ref:   (1,)          SMEM scalar bias, already scaled by 0.1
    # o_ref:   (NB, 1, H*W)  VMEM output tile (lane-dense)
    NB = x_ref.shape[0]
    HW = H * W

    # Border masks for the 8 shifted taps (built once per grid step).
    flat = jax.lax.broadcasted_iota(jnp.int32, (1, HW), 1)
    col = col_ref[...]
    row_mask = (flat >= W, None, flat < (H - 1) * W)      # dy = 0, 1, 2
    col_mask = (col >= 1, None, col <= W - 2)             # dx = 0, 1, 2

    w = w_ref[...]            # (9, C), loaded once per step
    bias = b_ref[0]           # scalar

    for b in range(NB):
        # Channel contraction on the MXU: all 9 tap images at once.
        taps = jnp.dot(w, x_ref[b], preferred_element_type=jnp.float32)  # (9, HW)

        # Center tap (dy=1, dx=1): no shift, no mask.
        acc = taps[4:5, :]

        # Remaining 8 taps: static lane roll + border mask, then accumulate.
        for dy in range(3):
            for dx in range(3):
                if dy == 1 and dx == 1:
                    continue
                k = dy * 3 + dx
                t = taps[k:k + 1, :]
                # want result[i] = t[i + (dy-1)*W + (dx-1)]  ->  roll by the negative
                shift = (1 - dy) * W + (1 - dx)
                t = jnp.roll(t, shift, axis=1)
                rm, cm = row_mask[dy], col_mask[dx]
                if rm is None:
                    mask = cm
                elif cm is None:
                    mask = rm
                else:
                    mask = jnp.logical_and(rm, cm)
                acc = acc + jnp.where(mask, t, 0.0)

        o_ref[b] = (acc + bias).astype(o_ref.dtype)


@jax.jit
def cls_pred_head_forward(x_nchw, weight_oihw, bias):
    """Forward pass of cls_pred_head.

    x_nchw:      (N, C, H, W)  float32
    weight_oihw: (1, C, 3, 3)  float32  (PyTorch Conv2d layout)
    bias:        (1,)          float32
    returns:     (N, 1, H, W)  float32   ==  0.1 * conv3x3(x) (+ bias, also scaled)
    """
    N, C, H, W = x_nchw.shape
    HW = H * W

    # Fold the 0.1 output scale into the (tiny) conv weights / bias.
    w9c = jnp.transpose((0.1 * weight_oihw).astype(jnp.float32).reshape(C, 9))  # (9, C)
    b = (0.1 * bias).astype(jnp.float32).reshape(1)

    # Merge H,W into one lane-dense axis: metadata-only reshape, no HBM pass.
    x_flat = x_nchw.reshape(N, C, HW)

    # Column index of every flat spatial position (tiny constant input used for
    # the left/right border masks inside the kernel).
    col_ids = jax.lax.broadcasted_iota(jnp.int32, (H, W), 1).reshape(1, HW)

    # Batch elements per grid step: amortize the ~0.35us/step overhead on small
    # inputs while keeping the double-buffered input tile well under VMEM.
    bytes_per_elem = C * HW * 4
    block_n = max(1, min(N, (8 * 1024 * 1024) // max(bytes_per_elem, 1)))
    while N % block_n:
        block_n -= 1

    kernel = functools.partial(_conv3x3_kernel, H=H, W=W)

    out = pl.pallas_call(
        kernel,
        out_shape=jax.ShapeDtypeStruct((N, 1, HW), jnp.float32),
        grid_spec=pltpu.PrefetchScalarGridSpec(
            num_scalar_prefetch=0,
            grid=(N // block_n,),
            in_specs=[
                pl.BlockSpec((block_n, C, HW), lambda n: (n, 0, 0)),
                pl.BlockSpec((9, C), lambda n: (0, 0)),
                pl.BlockSpec((1, HW), lambda n: (0, 0)),
                pl.BlockSpec(memory_space=pltpu.MemorySpace.SMEM),
            ],
            out_specs=pl.BlockSpec((block_n, 1, HW), lambda n: (n, 0, 0)),
        ),
        compiler_params=pltpu.CompilerParams(
            dimension_semantics=("parallel",),
            vmem_limit_bytes=32 * 1024 * 1024,
        ),
    )(x_flat, w9c, col_ids, b)

    # (N, 1, H*W) -> (N, 1, H, W): metadata-only reshape.
    return out.reshape(N, 1, H, W)


def _reference_forward(x_nchw, weight_oihw, bias):
    # Pure-JAX reference (lax conv) for a sanity check.
    out = jax.lax.conv_general_dilated(
        x_nchw, weight_oihw,
        window_strides=(1, 1), padding=((1, 1), (1, 1)),
        dimension_numbers=("NCHW", "OIHW", "NCHW"),
        precision=jax.lax.Precision.HIGHEST,
    )
    return 0.1 * (out + bias.reshape(1, -1, 1, 1))


if __name__ == "__main__":
    # Small shapes consistent with the module's forward: x is (N, C, H, W).
    N, C, H, W = 2, 4, 16, 16

    key = jax.random.PRNGKey(0)
    kx, kw, kb = jax.random.split(key, 3)

    x = jax.random.normal(kx, (N, C, H, W), dtype=jnp.float32)
    # Deterministic "Conv2d(inchannels, 1, 3)" params: weight (1, C, 3, 3), bias (1,)
    weight = 0.1 * jax.random.normal(kw, (1, C, 3, 3), dtype=jnp.float32)
    bias = 0.1 * jax.random.normal(kb, (1,), dtype=jnp.float32)

    out = cls_pred_head_forward(x, weight, bias)
    out = jax.block_until_ready(out)

    ref = jax.block_until_ready(_reference_forward(x, weight, bias))
    assert out.shape == (N, 1, H, W)
    assert jnp.allclose(out, ref, atol=1e-3, rtol=1e-3)

    print("KERNEL_OK")
</pallas_src>

<mosaic_0001>
module attributes {stable_mosaic.version = 11 : i64} {
  func.func @_conv3x3_kernel(%arg0: i32, %arg1: memref<2x4x256xf32, #tpu.memory_space<vmem>>, %arg2: memref<9x4xf32, #tpu.memory_space<vmem>>, %arg3: memref<1x256xi32, #tpu.memory_space<vmem>>, %arg4: memref<1xf32, #tpu.memory_space<smem>>, %arg5: memref<2x1x256xf32, #tpu.memory_space<vmem>>) attributes {dimension_semantics = [#tpu.dimension_semantics<parallel>], iteration_bounds = array<i64: 1>, scalar_prefetch = 0 : i64, scratch_operands = 0 : i64, tpu.core_type = #tpu.core_type<tc>, window_params = [{transform_indices = @transform_0, window_bounds = array<i64: 2, 4, 256>}, {pipeline_mode = #tpu.pipeline_mode<synchronous>, transform_indices = @transform_1, window_bounds = array<i64: 9, 4>}, {pipeline_mode = #tpu.pipeline_mode<synchronous>, transform_indices = @transform_2, window_bounds = array<i64: 1, 256>}, {transform_indices = @transform_3, window_bounds = array<i64: 1>}, {transform_indices = @transform_4, window_bounds = array<i64: 2, 1, 256>}]} {
    %0 = tpu.iota {dimensions = array<i32: 1>} : vector<1x256xi32>
    %c0 = arith.constant 0 : index
    %c0_0 = arith.constant 0 : index
    %1 = vector.load %arg3[%c0, %c0_0] : memref<1x256xi32, #tpu.memory_space<vmem>>, vector<1x256xi32>
    %c16_i32 = arith.constant 16 : i32
    %2 = vector.broadcast %c16_i32 : i32 to vector<1x256xi32>
    %3 = arith.cmpi sge, %0, %2 : vector<1x256xi32>
    %c240_i32 = arith.constant 240 : i32
    %4 = vector.broadcast %c240_i32 : i32 to vector<1x256xi32>
    %5 = arith.cmpi slt, %0, %4 : vector<1x256xi32>
    %c1_i32 = arith.constant 1 : i32
    %6 = vector.broadcast %c1_i32 : i32 to vector<1x256xi32>
    %7 = arith.cmpi sge, %1, %6 : vector<1x256xi32>
    %c14_i32 = arith.constant 14 : i32
    %8 = vector.broadcast %c14_i32 : i32 to vector<1x256xi32>
    %9 = arith.cmpi sle, %1, %8 : vector<1x256xi32>
    %c0_1 = arith.constant 0 : index
    %c0_2 = arith.constant 0 : index
    %10 = vector.load %arg2[%c0_1, %c0_2] : memref<9x4xf32, #tpu.memory_space<vmem>>, vector<9x4xf32>
    %c0_3 = arith.constant 0 : index
    %11 = memref.load %arg4[%c0_3] : memref<1xf32, #tpu.memory_space<smem>>
    %c0_4 = arith.constant 0 : index
    %c0_5 = arith.constant 0 : index
    %c0_6 = arith.constant 0 : index
    %12 = vector.load %arg1[%c0_4, %c0_5, %c0_6] : memref<2x4x256xf32, #tpu.memory_space<vmem>>, vector<1x4x256xf32>
    %13 = vector.shape_cast %12 : vector<1x4x256xf32> to vector<4x256xf32>
    %cst = arith.constant dense<0.000000e+00> : vector<9x256xf32>
    %14 = tpu.matmul %10, %13, %cst {dimension_numbers = #tpu.dot_dimension_numbers<[1], [0], [0], [1], [0, 0, 1, 1], [], []>} : vector<9x4xf32>, vector<4x256xf32>, vector<9x256xf32> -> vector<9x256xf32>
    %15 = vector.extract_strided_slice %14 {offsets = [4, 0], sizes = [1, 256], strides = [1, 1]} : vector<9x256xf32> to vector<1x256xf32>
    %16 = vector.extract_strided_slice %14 {offsets = [0, 0], sizes = [1, 256], strides = [1, 1]} : vector<9x256xf32> to vector<1x256xf32>
    %17 = vector.extract_strided_slice %16 {offsets = [0, 239], sizes = [1, 17], strides = [1, 1]} : vector<1x256xf32> to vector<1x17xf32>
    %18 = vector.extract_strided_slice %16 {offsets = [0, 0], sizes = [1, 239], strides = [1, 1]} : vector<1x256xf32> to vector<1x239xf32>
    %19 = tpu.concatenate %17, %18 in 1 : vector<1x17xf32>, vector<1x239xf32> -> vector<1x256xf32>
    %20 = arith.andi %3, %7 : vector<1x256xi1>
    %cst_7 = arith.constant 0.000000e+00 : f32
    %21 = vector.broadcast %cst_7 : f32 to vector<1x256xf32>
    %22 = arith.select %20, %19, %21 : vector<1x256xi1>, vector<1x256xf32>
    %23 = arith.addf %15, %22 : vector<1x256xf32>
    %24 = vector.extract_strided_slice %14 {offsets = [1, 0], sizes = [1, 256], strides = [1, 1]} : vector<9x256xf32> to vector<1x256xf32>
    %25 = vector.extract_strided_slice %24 {offsets = [0, 240], sizes = [1, 16], strides = [1, 1]} : vector<1x256xf32> to vector<1x16xf32>
    %26 = vector.extract_strided_slice %24 {offsets = [0, 0], sizes = [1, 240], strides = [1, 1]} : vector<1x256xf32> to vector<1x240xf32>
    %27 = tpu.concatenate %25, %26 in 1 : vector<1x16xf32>, vector<1x240xf32> -> vector<1x256xf32>
    %cst_8 = arith.constant 0.000000e+00 : f32
    %28 = vector.broadcast %cst_8 : f32 to vector<1x256xf32>
    %29 = arith.select %3, %27, %28 : vector<1x256xi1>, vector<1x256xf32>
    %30 = arith.addf %23, %29 : vector<1x256xf32>
    %31 = vector.extract_strided_slice %14 {offsets = [2, 0], sizes = [1, 256], strides = [1, 1]} : vector<9x256xf32> to vector<1x256xf32>
    %32 = vector.extract_strided_slice %31 {offsets = [0, 241], sizes = [1, 15], strides = [1, 1]} : vector<1x256xf32> to vector<1x15xf32>
    %33 = vector.extract_strided_slice %31 {offsets = [0, 0], sizes = [1, 241], strides = [1, 1]} : vector<1x256xf32> to vector<1x241xf32>
    %34 = tpu.concatenate %32, %33 in 1 : vector<1x15xf32>, vector<1x241xf32> -> vector<1x256xf32>
    %35 = arith.andi %3, %9 : vector<1x256xi1>
    %cst_9 = arith.constant 0.000000e+00 : f32
    %36 = vector.broadcast %cst_9 : f32 to vector<1x256xf32>
    %37 = arith.select %35, %34, %36 : vector<1x256xi1>, vector<1x256xf32>
    %38 = arith.addf %30, %37 : vector<1x256xf32>
    %39 = vector.extract_strided_slice %14 {offsets = [3, 0], sizes = [1, 256], strides = [1, 1]} : vector<9x256xf32> to vector<1x256xf32>
    %40 = vector.extract_strided_slice %39 {offsets = [0, 255], sizes = [1, 1], strides = [1, 1]} : vector<1x256xf32> to vector<1x1xf32>
    %41 = vector.extract_strided_slice %39 {offsets = [0, 0], sizes = [1, 255], strides = [1, 1]} : vector<1x256xf32> to vector<1x255xf32>
    %42 = tpu.concatenate %40, %41 in 1 : vector<1x1xf32>, vector<1x255xf32> -> vector<1x256xf32>
    %cst_10 = arith.constant 0.000000e+00 : f32
    %43 = vector.broadcast %cst_10 : f32 to vector<1x256xf32>
    %44 = arith.select %7, %42, %43 : vector<1x256xi1>, vector<1x256xf32>
    %45 = arith.addf %38, %44 : vector<1x256xf32>
    %46 = vector.extract_strided_slice %14 {offsets = [5, 0], sizes = [1, 256], strides = [1, 1]} : vector<9x256xf32> to vector<1x256xf32>
    %47 = vector.extract_strided_slice %46 {offsets = [0, 1], sizes = [1, 255], strides = [1, 1]} : vector<1x256xf32> to vector<1x255xf32>
    %48 = vector.extract_strided_slice %46 {offsets = [0, 0], sizes = [1, 1], strides = [1, 1]} : vector<1x256xf32> to vector<1x1xf32>
    %49 = tpu.concatenate %47, %48 in 1 : vector<1x255xf32>, vector<1x1xf32> -> vector<1x256xf32>
    %cst_11 = arith.constant 0.000000e+00 : f32
    %50 = vector.broadcast %cst_11 : f32 to vector<1x256xf32>
    %51 = arith.select %9, %49, %50 : vector<1x256xi1>, vector<1x256xf32>
    %52 = arith.addf %45, %51 : vector<1x256xf32>
    %53 = vector.extract_strided_slice %14 {offsets = [6, 0], sizes = [1, 256], strides = [1, 1]} : vector<9x256xf32> to vector<1x256xf32>
    %54 = vector.extract_strided_slice %53 {offsets = [0, 15], sizes = [1, 241], strides = [1, 1]} : vector<1x256xf32> to vector<1x241xf32>
    %55 = vector.extract_strided_slice %53 {offsets = [0, 0], sizes = [1, 15], strides = [1, 1]} : vector<1x256xf32> to vector<1x15xf32>
    %56 = tpu.concatenate %54, %55 in 1 : vector<1x241xf32>, vector<1x15xf32> -> vector<1x256xf32>
    %57 = arith.andi %5, %7 : vector<1x256xi1>
    %cst_12 = arith.constant 0.000000e+00 : f32
    %58 = vector.broadcast %cst_12 : f32 to vector<1x256xf32>
    %59 = arith.select %57, %56, %58 : vector<1x256xi1>, vector<1x256xf32>
    %60 = arith.addf %52, %59 : vector<1x256xf32>
    %61 = vector.extract_strided_slice %14 {offsets = [7, 0], sizes = [1, 256], strides = [1, 1]} : vector<9x256xf32> to vector<1x256xf32>
    %62 = vector.extract_strided_slice %61 {offsets = [0, 16], sizes = [1, 240], strides = [1, 1]} : vector<1x256xf32> to vector<1x240xf32>
    %63 = vector.extract_strided_slice %61 {offsets = [0, 0], sizes = [1, 16], strides = [1, 1]} : vector<1x256xf32> to vector<1x16xf32>
    %64 = tpu.concatenate %62, %63 in 1 : vector<1x240xf32>, vector<1x16xf32> -> vector<1x256xf32>
    %cst_13 = arith.constant 0.000000e+00 : f32
    %65 = vector.broadcast %cst_13 : f32 to vector<1x256xf32>
    %66 = arith.select %5, %64, %65 : vector<1x256xi1>, vector<1x256xf32>
    %67 = arith.addf %60, %66 : vector<1x256xf32>
    %68 = vector.extract_strided_slice %14 {offsets = [8, 0], sizes = [1, 256], strides = [1, 1]} : vector<9x256xf32> to vector<1x256xf32>
    %69 = vector.extract_strided_slice %68 {offsets = [0, 17], sizes = [1, 239], strides = [1, 1]} : vector<1x256xf32> to vector<1x239xf32>
    %70 = vector.extract_strided_slice %68 {offsets = [0, 0], sizes = [1, 17], strides = [1, 1]} : vector<1x256xf32> to vector<1x17xf32>
    %71 = tpu.concatenate %69, %70 in 1 : vector<1x239xf32>, vector<1x17xf32> -> vector<1x256xf32>
    %72 = arith.andi %5, %9 : vector<1x256xi1>
    %cst_14 = arith.constant 0.000000e+00 : f32
    %73 = vector.broadcast %cst_14 : f32 to vector<1x256xf32>
    %74 = arith.select %72, %71, %73 : vector<1x256xi1>, vector<1x256xf32>
    %75 = arith.addf %67, %74 : vector<1x256xf32>
    %76 = vector.broadcast %11 : f32 to vector<1x256xf32>
    %77 = arith.addf %75, %76 : vector<1x256xf32>
    %c0_15 = arith.constant 0 : index
    %c0_16 = arith.constant 0 : index
    %c0_17 = arith.constant 0 : index
    %78 = vector.load %arg5[%c0_15, %c0_16, %c0_17] : memref<2x1x256xf32, #tpu.memory_space<vmem>>, vector<1x1x256xf32>
    %79 = vector.shape_cast %78 : vector<1x1x256xf32> to vector<1x256xf32>
    %80 = vector.shape_cast %77 : vector<1x256xf32> to vector<1x1x256xf32>
    tpu.vector_store %arg5[%c0_15, %c0_16, %c0_17], %80 {strides = array<i32>} : memref<2x1x256xf32, #tpu.memory_space<vmem>>, vector<1x1x256xf32>,
    %c1 = arith.constant 1 : index
    %c0_18 = arith.constant 0 : index
    %c0_19 = arith.constant 0 : index
    %81 = vector.load %arg1[%c1, %c0_18, %c0_19] : memref<2x4x256xf32, #tpu.memory_space<vmem>>, vector<1x4x256xf32>
    %82 = vector.shape_cast %81 : vector<1x4x256xf32> to vector<4x256xf32>
    %cst_20 = arith.constant dense<0.000000e+00> : vector<9x256xf32>
    %83 = tpu.matmul %10, %82, %cst_20 {dimension_numbers = #tpu.dot_dimension_numbers<[1], [0], [0], [1], [0, 0, 1, 1], [], []>} : vector<9x4xf32>, vector<4x256xf32>, vector<9x256xf32> -> vector<9x256xf32>
    %84 = vector.extract_strided_slice %83 {offsets = [4, 0], sizes = [1, 256], strides = [1, 1]} : vector<9x256xf32> to vector<1x256xf32>
    %85 = vector.extract_strided_slice %83 {offsets = [0, 0], sizes = [1, 256], strides = [1, 1]} : vector<9x256xf32> to vector<1x256xf32>
    %86 = vector.extract_strided_slice %85 {offsets = [0, 239], sizes = [1, 17], strides = [1, 1]} : vector<1x256xf32> to vector<1x17xf32>
    %87 = vector.extract_strided_slice %85 {offsets = [0, 0], sizes = [1, 239], strides = [1, 1]} : vector<1x256xf32> to vector<1x239xf32>
    %88 = tpu.concatenate %86, %87 in 1 : vector<1x17xf32>, vector<1x239xf32> -> vector<1x256xf32>
    %89 = arith.andi %3, %7 : vector<1x256xi1>
    %cst_21 = arith.constant 0.000000e+00 : f32
    %90 = vector.broadcast %cst_21 : f32 to vector<1x256xf32>
    %91 = arith.select %89, %88, %90 : vector<1x256xi1>, vector<1x256xf32>
    %92 = arith.addf %84, %91 : vector<1x256xf32>
    %93 = vector.extract_strided_slice %83 {offsets = [1, 0], sizes = [1, 256], strides = [1, 1]} : vector<9x256xf32> to vector<1x256xf32>
    %94 = vector.extract_strided_slice %93 {offsets = [0, 240], sizes = [1, 16], strides = [1, 1]} : vector<1x256xf32> to vector<1x16xf32>
    %95 = vector.extract_strided_slice %93 {offsets = [0, 0], sizes = [1, 240], strides = [1, 1]} : vector<1x256xf32> to vector<1x240xf32>
    %96 = tpu.concatenate %94, %95 in 1 : vector<1x16xf32>, vector<1x240xf32> -> vector<1x256xf32>
    %cst_22 = arith.constant 0.000000e+00 : f32
    %97 = vector.broadcast %cst_22 : f32 to vector<1x256xf32>
    %98 = arith.select %3, %96, %97 : vector<1x256xi1>, vector<1x256xf32>
    %99 = arith.addf %92, %98 : vector<1x256xf32>
    %100 = vector.extract_strided_slice %83 {offsets = [2, 0], sizes = [1, 256], strides = [1, 1]} : vector<9x256xf32> to vector<1x256xf32>
    %101 = vector.extract_strided_slice %100 {offsets = [0, 241], sizes = [1, 15], strides = [1, 1]} : vector<1x256xf32> to vector<1x15xf32>
    %102 = vector.extract_strided_slice %100 {offsets = [0, 0], sizes = [1, 241], strides = [1, 1]} : vector<1x256xf32> to vector<1x241xf32>
    %103 = tpu.concatenate %101, %102 in 1 : vector<1x15xf32>, vector<1x241xf32> -> vector<1x256xf32>
    %104 = arith.andi %3, %9 : vector<1x256xi1>
    %cst_23 = arith.constant 0.000000e+00 : f32
    %105 = vector.broadcast %cst_23 : f32 to vector<1x256xf32>
    %106 = arith.select %104, %103, %105 : vector<1x256xi1>, vector<1x256xf32>
    %107 = arith.addf %99, %106 : vector<1x256xf32>
    %108 = vector.extract_strided_slice %83 {offsets = [3, 0], sizes = [1, 256], strides = [1, 1]} : vector<9x256xf32> to vector<1x256xf32>
    %109 = vector.extract_strided_slice %108 {offsets = [0, 255], sizes = [1, 1], strides = [1, 1]} : vector<1x256xf32> to vector<1x1xf32>
    %110 = vector.extract_strided_slice %108 {offsets = [0, 0], sizes = [1, 255], strides = [1, 1]} : vector<1x256xf32> to vector<1x255xf32>
    %111 = tpu.concatenate %109, %110 in 1 : vector<1x1xf32>, vector<1x255xf32> -> vector<1x256xf32>
    %cst_24 = arith.constant 0.000000e+00 : f32
    %112 = vector.broadcast %cst_24 : f32 to vector<1x256xf32>
    %113 = arith.select %7, %111, %112 : vector<1x256xi1>, vector<1x256xf32>
    %114 = arith.addf %107, %113 : vector<1x256xf32>
    %115 = vector.extract_strided_slice %83 {offsets = [5, 0], sizes = [1, 256], strides = [1, 1]} : vector<9x256xf32> to vector<1x256xf32>
    %116 = vector.extract_strided_slice %115 {offsets = [0, 1], sizes = [1, 255], strides = [1, 1]} : vector<1x256xf32> to vector<1x255xf32>
    %117 = vector.extract_strided_slice %115 {offsets = [0, 0], sizes = [1, 1], strides = [1, 1]} : vector<1x256xf32> to vector<1x1xf32>
    %118 = tpu.concatenate %116, %117 in 1 : vector<1x255xf32>, vector<1x1xf32> -> vector<1x256xf32>
    %cst_25 = arith.constant 0.000000e+00 : f32
    %119 = vector.broadcast %cst_25 : f32 to vector<1x256xf32>
    %120 = arith.select %9, %118, %119 : vector<1x256xi1>, vector<1x256xf32>
    %121 = arith.addf %114, %120 : vector<1x256xf32>
    %122 = vector.extract_strided_slice %83 {offsets = [6, 0], sizes = [1, 256], strides = [1, 1]} : vector<9x256xf32> to vector<1x256xf32>
    %123 = vector.extract_strided_slice %122 {offsets = [0, 15], sizes = [1, 241], strides = [1, 1]} : vector<1x256xf32> to vector<1x241xf32>
    %124 = vector.extract_strided_slice %122 {offsets = [0, 0], sizes = [1, 15], strides = [1, 1]} : vector<1x256xf32> to vector<1x15xf32>
    %125 = tpu.concatenate %123, %124 in 1 : vector<1x241xf32>, vector<1x15xf32> -> vector<1x256xf32>
    %126 = arith.andi %5, %7 : vector<1x256xi1>
    %cst_26 = arith.constant 0.000000e+00 : f32
    %127 = vector.broadcast %cst_26 : f32 to vector<1x256xf32>
    %128 = arith.select %126, %125, %127 : vector<1x256xi1>, vector<1x256xf32>
    %129 = arith.addf %121, %128 : vector<1x256xf32>
    %130 = vector.extract_strided_slice %83 {offsets = [7, 0], sizes = [1, 256], strides = [1, 1]} : vector<9x256xf32> to vector<1x256xf32>
    %131 = vector.extract_strided_slice %130 {offsets = [0, 16], sizes = [1, 240], strides = [1, 1]} : vector<1x256xf32> to vector<1x240xf32>
    %132 = vector.extract_strided_slice %130 {offsets = [0, 0], sizes = [1, 16], strides = [1, 1]} : vector<1x256xf32> to vector<1x16xf32>
    %133 = tpu.concatenate %131, %132 in 1 : vector<1x240xf32>, vector<1x16xf32> -> vector<1x256xf32>
    %cst_27 = arith.constant 0.000000e+00 : f32
    %134 = vector.broadcast %cst_27 : f32 to vector<1x256xf32>
    %135 = arith.select %5, %133, %134 : vector<1x256xi1>, vector<1x256xf32>
    %136 = arith.addf %129, %135 : vector<1x256xf32>
    %137 = vector.extract_strided_slice %83 {offsets = [8, 0], sizes = [1, 256], strides = [1, 1]} : vector<9x256xf32> to vector<1x256xf32>
    %138 = vector.extract_strided_slice %137 {offsets = [0, 17], sizes = [1, 239], strides = [1, 1]} : vector<1x256xf32> to vector<1x239xf32>
    %139 = vector.extract_strided_slice %137 {offsets = [0, 0], sizes = [1, 17], strides = [1, 1]} : vector<1x256xf32> to vector<1x17xf32>
    %140 = tpu.concatenate %138, %139 in 1 : vector<1x239xf32>, vector<1x17xf32> -> vector<1x256xf32>
    %141 = arith.andi %5, %9 : vector<1x256xi1>
    %cst_28 = arith.constant 0.000000e+00 : f32
    %142 = vector.broadcast %cst_28 : f32 to vector<1x256xf32>
    %143 = arith.select %141, %140, %142 : vector<1x256xi1>, vector<1x256xf32>
    %144 = arith.addf %136, %143 : vector<1x256xf32>
    %145 = vector.broadcast %11 : f32 to vector<1x256xf32>
    %146 = arith.addf %144, %145 : vector<1x256xf32>
    %c1_29 = arith.constant 1 : index
    %c0_30 = arith.constant 0 : index
    %c0_31 = arith.constant 0 : index
    %147 = vector.load %arg5[%c1_29, %c0_30, %c0_31] : memref<2x1x256xf32, #tpu.memory_space<vmem>>, vector<1x1x256xf32>
    %148 = vector.shape_cast %147 : vector<1x1x256xf32> to vector<1x256xf32>
    %149 = vector.shape_cast %146 : vector<1x256xf32> to vector<1x1x256xf32>
    tpu.vector_store %arg5[%c1_29, %c0_30, %c0_31], %149 {strides = array<i32>} : memref<2x1x256xf32, #tpu.memory_space<vmem>>, vector<1x1x256xf32>,
    return
  }
  func.func @transform_0(%arg0: i32) -> (i32, i32, i32) {
    %c0_i32 = arith.constant 0 : i32
    %c0_i32_0 = arith.constant 0 : i32
    %c0_i32_1 = arith.constant 0 : i32
    return %arg0, %c0_i32, %c0_i32_0 : i32, i32, i32
  }
  func.func @transform_1(%arg0: i32) -> (i32, i32) {
    %c0_i32 = arith.constant 0 : i32
    %c0_i32_0 = arith.constant 0 : i32
    %c0_i32_1 = arith.constant 0 : i32
    return %c0_i32, %c0_i32_0 : i32, i32
  }
  func.func @transform_2(%arg0: i32) -> (i32, i32) {
    %c0_i32 = arith.constant 0 : i32
    %c0_i32_0 = arith.constant 0 : i32
    %c0_i32_1 = arith.constant 0 : i32
    return %c0_i32, %c0_i32_0 : i32, i32
  }
  func.func @transform_3(%arg0: i32) -> i32 {
    %c0_i32 = arith.constant 0 : i32
    %c0_i32_0 = arith.constant 0 : i32
    return %c0_i32 : i32
  }
  func.func @transform_4(%arg0: i32) -> (i32, i32, i32) {
    %c0_i32 = arith.constant 0 : i32
    %c0_i32_0 = arith.constant 0 : i32
    %c0_i32_1 = arith.constant 0 : i32
    return %arg0, %c0_i32, %c0_i32_0 : i32, i32, i32
  }
}

</mosaic_0001>

<llo_original>
// kernel: cls_pred_head_forward.1
$region0: #{cls_pred_head_forward.1}
  #allocation0 [shape = 'u32[]', space=smem, size = 0x4, offset = 0x4, fixed_abs, tag = 'smem constant byte address 0x4 - core index']
  #allocation1 [shape = 'u32[144,128]{1,0:T(1,128)}', space=vmem, size = 0x12000, scoped, tag = 'internal scratch']
  #allocation2 [shape = 'f32[1]{0:T(128)S(6)}', space=smem, size = 0x200, scoped, tag = 'scoped memory for cls_pred_head_forward.1']
  %s0 = inlined_call_operand.vmem [shape: f32[2,4,256], index: 0, kind: input, shape index: {}]
  %s1 = inlined_call_operand.vmem [shape: f32[9,4], index: 1, kind: input, shape index: {}]
  %s2 = inlined_call_operand.vmem [shape: s32[1,256], index: 2, kind: input, shape index: {}]
  %s3 = inlined_call_operand.<no memory space> [shape: f32[1], index: 3, kind: input, shape index: {}]
  %s4 = inlined_call_operand.vmem [shape: f32[2,1,256], index: 4, kind: output, shape index: {}]
  %s5 = sld [smem:[#allocation0]]
  $region26: #{cls_pred_head_forward.1} parent=0
    _
  %s7 = ssub.s32 1, %s5
  %s8 = scalar_select 0, %s7, %s5
  %9 = sst [smem:[#allocation2]] %s3
  // Predicated region
  $region2: #{cls_pred_head_forward.1} parent=0 // pred_check
    _
  $region3: #{cls_pred_head_forward.1} parent=0 // pred_check_branch
    %11 = sbr.rel (0) target = $region5
  $region4: #{cls_pred_head_forward.1} parent=0 // pred_region
    _
  $region5: #{cls_pred_head_forward.1} parent=0 // pred_fallthru
    _
  // Predicated region
  $region6: #{cls_pred_head_forward.1} parent=0 // pred_check
    _
  $region7: #{cls_pred_head_forward.1} parent=0 // pred_check_branch
    %13 = sbr.rel (0) target = $region9
  $region8: #{cls_pred_head_forward.1} parent=0 // pred_region
    _
  $region9: #{cls_pred_head_forward.1} parent=0 // pred_fallthru
    _
  // Predicated region
  $region10: #{cls_pred_head_forward.1} parent=0 // pred_check
    _
  $region11: #{cls_pred_head_forward.1} parent=0 // pred_check_branch
    %15 = sbr.rel (0) target = $region13
  $region12: #{cls_pred_head_forward.1} parent=0 // pred_region
    _
  $region13: #{cls_pred_head_forward.1} parent=0 // pred_fallthru
    _
  // Predicated region
  $region14: #{cls_pred_head_forward.1} parent=0 // pred_check
    _
  $region15: #{cls_pred_head_forward.1} parent=0 // pred_check_branch
    %17 = sbr.rel (0) target = $region17
  $region16: #{cls_pred_head_forward.1} parent=0 // pred_region
    _
  $region17: #{cls_pred_head_forward.1} parent=0 // pred_fallthru
    _
  %v18 = vlaneseq
  %v19 = vand.u32 %v18, 127
  %v20 = vadd.s32 %v19, 128
  %v21 = vld [vmem:[%s2] sm:$0x3]
  %vm22 = vcmp.ge.s32.totalorder %v19, 16
  %vm23 = vcmp.ge.s32.totalorder %v20, 16
  %vm24 = vcmp.lt.s32.totalorder %v19, 240
  %vm25 = vcmp.lt.s32.totalorder %v20, 240
  %vm26 = vcmp.ge.s32.totalorder %v21, 1
  %vm27 = vcmp.le.s32.totalorder %v21, 14
  %v28 = vld [vmem:[%s1] sm:$0xff]
  %v29 = vld [vmem:[%s1 + $0x8] sm:$0x1]
  %s30 = sld [smem:[#allocation2]]
  %v31 = vld [vmem:[%s0] sm:$0xff]
  %v33 = vcombine.high %v31, %v31
  %vm34 = vcmask 31744
  %v36 = vsel %vm34, %v28, 0
  %v39 = vsel %vm34, %v29, 0
  %vm41 = vcmask 1043456
  %v42 = vsel %vm41, %v31, 0
  %v44 = vsel %vm41, %v33, 0
  %46 = vmatprep.subr.mxu0 %v44
  %47 = vmatpush1.msra.mxu0 %v42
  %48 = vmatprep.subr.mxu0 0.0
  %49 = vmatpush1.msra.mxu0 0.0
  %50 = vmatprep.subr.mxu0 0.0
  %51 = vmatpush1.msra.mxu0 0.0
  %52 = vmatprep.subr.mxu0 0.0
  %53 = vmatpush1.msra.mxu0 0.0
  %54 = vmatprep.subr.mxu0 0.0
  %55 = vmatpush1.msra.mxu0 0.0
  %56 = vmatprep.subr.mxu0 0.0
  %57 = vmatpush1.msra.mxu0 0.0
  %58 = vmatprep.subr.mxu0 0.0
  %59 = vmatpush1.msra.mxu0 0.0
  %60 = vmatprep.subr.mxu0 0.0
  %61 = vmatpush1.msra.mxu0 0.0
  %62 = vmatprep.subr.mxu0 0.0
  %63 = vmatpush1.msra.mxu0 0.0
  %64 = vmatprep.subr.mxu0 0.0
  %65 = vmatpush1.msra.mxu0 0.0
  %66 = vmatprep.subr.mxu0 0.0
  %67 = vmatpush1.msra.mxu0 0.0
  %68 = vmatprep.subr.mxu0 0.0
  %69 = vmatpush1.msra.mxu0 0.0
  %70 = vmatprep.subr.mxu0 0.0
  %71 = vmatpush1.msra.mxu0 0.0
  %72 = vmatprep.subr.mxu0 0.0
  %73 = vmatpush1.msra.mxu0 0.0
  %74 = vmatprep.subr.mxu0 0.0
  %75 = vmatpush1.msra.mxu0 0.0
  %76 = vmatprep.subr.mxu0 0.0
  %77 = vmatpush1.msra.mxu0 0.0
  %78 = vmatprep.subr.mxu0 0.0
  %79 = vmatpush1.msra.mxu0 0.0
  %80 = vmatprep.subr.mxu0 0.0
  %81 = vmatpush1.msra.mxu0 0.0
  %82 = vmatprep.subr.mxu0 0.0
  %83 = vmatpush1.msra.mxu0 0.0
  %84 = vmatprep.subr.mxu0 0.0
  %85 = vmatpush1.msra.mxu0 0.0
  %86 = vmatprep.subr.mxu0 0.0
  %87 = vmatpush1.msra.mxu0 0.0
  %88 = vmatprep.subr.mxu0 0.0
  %89 = vmatpush1.msra.mxu0 0.0
  %90 = vmatprep.subr.mxu0 0.0
  %91 = vmatpush1.msra.mxu0 0.0
  %92 = vmatprep.subr.mxu0 0.0
  %93 = vmatpush1.msra.mxu0 0.0
  %94 = vmatprep.subr.mxu0 0.0
  %95 = vmatpush1.msra.mxu0 0.0
  %96 = vmatprep.subr.mxu0 0.0
  %97 = vmatpush1.msra.mxu0 0.0
  %98 = vmatprep.subr.mxu0 0.0
  %99 = vmatpush1.msra.mxu0 0.0
  %100 = vmatprep.subr.mxu0 0.0
  %101 = vmatpush1.msra.mxu0 0.0
  %102 = vmatprep.subr.mxu0 0.0
  %103 = vmatpush1.msra.mxu0 0.0
  %104 = vmatprep.subr.mxu0 0.0
  %105 = vmatpush1.msra.mxu0 0.0
  %106 = vmatprep.subr.mxu0 0.0
  %107 = vmatpush1.msra.mxu0 0.0
  %108 = vmatprep.subr.mxu0 0.0
  %109 = vmatpush1.msra.mxu0 0.0
  %110 = vmatprep.mubr.f32.mxu0 0.0
  %111 = vmatmul.mubr.f32.gmra.mrb[0].mxu0 %v36
  %v112 = vpop.f32.mrb[0].mxu0
  %v113 = vadd.f32 0.0, %v112
  %v114 = vpop.f32.mrb[0].mxu0
  %v115 = vadd.f32 0.0, %v114
  %116 = vmatprep.mubr.f32.mxu0 0.0
  %117 = vmatmul.mubr.f32.gmra.mrb[0].mxu0 %v39
  %v118 = vpop.f32.mrb[0].mxu0
  %v119 = vadd.f32 0.0, %v118
  %v120 = vpop.f32.mrb[0].mxu0
  %v121 = vadd.f32 0.0, %v120
  %122 = vdwg.mxu0
  %124 = vrot.lane.b32.xlu0 %v115, 17
  %v125 = vpop.permute.xlu0 %124
  %128 = vrot.lane.b32.xlu0 %v113, 17
  %v129 = vpop.permute.xlu0 %128
  %vm130 = vcmask 138240
  %v131 = vsel %vm130, %v129, %v125
  %v134 = vsel %vm130, %v125, %v129
  %v135 = vsel %vm26, 1, 0
  %v136 = vlaneseq
  %v137 = vshrl.u32 %v136, 7
  %v138 = vsub.s32 0, %v137
  %v139 = vrot.slane %v135, %v138
  %v140 = vlaneseq
  %v141 = vshrl.u32 %v140, 7
  %v142 = vsub.s32 1, %v141
  %v143 = vrot.slane %v135, %v142
  %vm144 = vcmp.ne.s32.totalorder %v139, 0
  %vm145 = vcmp.ne.s32.totalorder %v143, 0
  %vm146 = vmand %vm22, %vm144
  %vm147 = vmand %vm23, %vm145
  %v148 = vsel %vm146, %v134, 0.0
  %v149 = vsel %vm147, %v131, 0.0
  %v152 = vrot.slane %v148, 4
  %v153 = vrot.slane %v149, 4
  %v156 = vadd.f32 %v113, %v152
  %v157 = vadd.f32 %v115, %v153
  %158 = vrot.lane.b32.xlu0 %v115, 16
  %v159 = vpop.permute.xlu0 %158
  %161 = vrot.lane.b32.xlu0 %v113, 16
  %v162 = vpop.permute.xlu0 %161
  %vm163 = vcmask 130048
  %v164 = vsel %vm163, %v162, %v159
  %v167 = vsel %vm163, %v159, %v162
  %v168 = vsel %vm22, %v167, 0.0
  %v169 = vsel %vm23, %v164, 0.0
  %v172 = vrot.slane %v168, 5
  %v173 = vrot.slane %v169, 5
  %v176 = vadd.f32 %v156, %v172
  %v177 = vadd.f32 %v157, %v173
  %178 = vrot.lane.b32.xlu0 %v115, 15
  %v179 = vpop.permute.xlu0 %178
  %181 = vrot.lane.b32.xlu0 %v113, 15
  %v182 = vpop.permute.xlu0 %181
  %vm183 = vcmask 121856
  %v184 = vsel %vm183, %v182, %v179
  %v186 = vsel %vm183, %v179, %v182
  %v187 = vsel %vm27, 1, 0
  %v188 = vlaneseq
  %v189 = vshrl.u32 %v188, 7
  %v190 = vsub.s32 0, %v189
  %v191 = vrot.slane %v187, %v190
  %v192 = vlaneseq
  %v193 = vshrl.u32 %v192, 7
  %v194 = vsub.s32 1, %v193
  %v195 = vrot.slane %v187, %v194
  %vm196 = vcmp.ne.s32.totalorder %v191, 0
  %vm197 = vcmp.ne.s32.totalorder %v195, 0
  %vm198 = vmand %vm22, %vm196
  %vm199 = vmand %vm23, %vm197
  %v201 = vrot.slane %v186, 2
  %v202 = vrot.slane %v184, 2
  %v205 = vsel %vm198, %v201, 0.0
  %v206 = vsel %vm199, %v202, 0.0
  %v209 = vrot.slane %v205, 4
  %v210 = vrot.slane %v206, 4
  %v213 = vadd.f32 %v176, %v209
  %v214 = vadd.f32 %v177, %v210
  %215 = vrot.lane.b32.xlu0 %v115, 1
  %v216 = vpop.permute.xlu0 %215
  %218 = vrot.lane.b32.xlu0 %v113, 1
  %v219 = vpop.permute.xlu0 %218
  %vm220 = vcmask 7168
  %v221 = vsel %vm220, %v219, %v216
  %v223 = vsel %vm220, %v216, %v219
  %v225 = vcombine.low %v223, %v221
  %v227 = vunpack.c.l.s4 1966171168
  %v228 = vunpack.c.0.s8 %v227
  %v229 = vlaneseq
  %v230 = vshrl.u32 %v229, 7
  %v231 = vsub.s32 %v228, %v230
  %v232 = vrot.slane %v225, %v231
  %v233 = vcombine.high %v232, %v232
  %v235 = vunpack.c.l.s4 1966171168
  %v236 = vunpack.c.0.s8 %v235
  %v237 = vlaneseq
  %v238 = vshrl.u32 %v237, 7
  %v239 = vsub.s32 %v236, %v238
  %v240 = vrot.slane %v233, %v239
  %v241 = vcombine.high %v240, %v240
  %v243 = vsel %vm26, %v241, 0.0
  %v245 = vlaneseq
  %v246 = vshrl.u32 %v245, 7
  %v247 = vsub.s32 0, %v246
  %v248 = vrot.slane %v243, %v247
  %v249 = vlaneseq
  %v250 = vshrl.u32 %v249, 7
  %v251 = vsub.s32 1, %v250
  %v252 = vrot.slane %v243, %v251
  %v255 = vadd.f32 %v213, %v248
  %v256 = vadd.f32 %v214, %v252
  %257 = vrot.lane.b32.xlu0 %v113, 127
  %v258 = vpop.permute.xlu0 %257
  %259 = vrot.lane.b32.xlu0 %v115, 127
  %v260 = vpop.permute.xlu0 %259
  %vm261 = vcmask 1039360
  %v262 = vsel %vm261, %v258, %v260
  %v265 = vsel %vm261, %v260, %v258
  %v267 = vcombine.high %v262, %v265
  %v269 = vunpack.c.l.s4 1966171168
  %v270 = vunpack.c.0.s8 %v269
  %v271 = vlaneseq
  %v272 = vshrl.u32 %v271, 7
  %v273 = vsub.s32 %v270, %v272
  %v274 = vrot.slane %v267, %v273
  %v275 = vcombine.high %v274, %v274
  %v277 = vunpack.c.l.s4 1966171168
  %v278 = vunpack.c.0.s8 %v277
  %v279 = vlaneseq
  %v280 = vshrl.u32 %v279, 7
  %v281 = vsub.s32 %v278, %v280
  %v282 = vrot.slane %v275, %v281
  %v284 = vsel %vm27, %v282, 0.0
  %v286 = vlaneseq
  %v287 = vshrl.u32 %v286, 7
  %v288 = vsub.s32 0, %v287
  %v289 = vrot.slane %v284, %v288
  %v290 = vlaneseq
  %v291 = vshrl.u32 %v290, 7
  %v292 = vsub.s32 1, %v291
  %v293 = vrot.slane %v284, %v292
  %v296 = vadd.f32 %v255, %v289
  %v297 = vadd.f32 %v256, %v293
  %298 = vrot.lane.b32.xlu0 %v113, 113
  %v299 = vpop.permute.xlu0 %298
  %300 = vrot.lane.b32.xlu0 %v115, 113
  %v301 = vpop.permute.xlu0 %300
  %vm302 = vcmask 924672
  %v303 = vsel %vm302, %v299, %v301
  %v306 = vsel %vm302, %v301, %v299
  %vm307 = vmand %vm24, %vm144
  %vm308 = vmand %vm25, %vm145
  %v310 = vrot.slane %v303, 6
  %v311 = vrot.slane %v306, 6
  %v314 = vsel %vm307, %v310, 0.0
  %v315 = vsel %vm308, %v311, 0.0
  %v318 = vrot.slane %v314, 4
  %v319 = vrot.slane %v315, 4
  %v322 = vadd.f32 %v296, %v318
  %v323 = vadd.f32 %v297, %v319
  %324 = vrot.lane.b32.xlu0 %v113, 112
  %v325 = vpop.permute.xlu0 %324
  %326 = vrot.lane.b32.xlu0 %v115, 112
  %v327 = vpop.permute.xlu0 %326
  %vm328 = vcmask 916480
  %v329 = vsel %vm328, %v325, %v327
  %v333 = vsel %vm328, %v327, %v325
  %v334 = vsel %vm24, %v329, 0.0
  %v335 = vsel %vm25, %v333, 0.0
  %v338 = vrot.slane %v334, 3
  %v339 = vrot.slane %v335, 3
  %v342 = vadd.f32 %v322, %v338
  %v343 = vadd.f32 %v323, %v339
  %346 = vrot.lane.b32.xlu0 %v119, 111
  %v347 = vpop.permute.xlu0 %346
  %348 = vrot.lane.b32.xlu0 %v121, 111
  %v349 = vpop.permute.xlu0 %348
  %vm350 = vcmask 908288
  %v351 = vsel %vm350, %v347, %v349
  %v355 = vsel %vm350, %v349, %v347
  %vm356 = vmand %vm24, %vm196
  %vm357 = vmand %vm25, %vm197
  %v358 = vsel %vm356, %v351, 0.0
  %v359 = vsel %vm357, %v355, 0.0
  %v362 = vrot.slane %v358, 4
  %v363 = vrot.slane %v359, 4
  %v366 = vadd.f32 %v342, %v362
  %v367 = vadd.f32 %v343, %v363
  %v368 = vstv %s30
  %v369 = vadd.f32 %v366, %v368
  %v370 = vadd.f32 %v367, %v368
  %v373 = vcombine.high %v369, %v370
  %v375 = vunpack.c.l.s4 1966171168
  %v376 = vunpack.c.0.s8 %v375
  %v377 = vlaneseq
  %v378 = vshrl.u32 %v377, 7
  %v379 = vsub.s32 %v376, %v378
  %v380 = vrot.slane %v373, %v379
  %v382 = vunpack.c.l.s4 1966171168
  %v383 = vunpack.c.0.s8 %v382
  %v384 = vlaneseq
  %v385 = vshrl.u32 %v384, 7
  %v386 = vsub.s32 %v383, %v385
  %v387 = vrot.slane %v380, %v386
  %v389 = vlaneseq
  %vm390 = vcmp.ge.s32.totalorder %v389, 0
  %vm391 = vcmp.lt.s32.totalorder %v389, 256
  %vm392 = vmand %vm390, %vm391
  %393 = vst.msk [vmem:[%s4] sm:$0x3] %vm392, %v387
  %s394 = scalar_lea.vmem %s0, 8
  %v395 = vld [vmem:[%s394] sm:$0xff]
  %v397 = vcombine.high %v395, %v395
  %v398 = vsel %vm41, %v395, 0
  %v400 = vsel %vm41, %v397, 0
  %402 = vmatprep.subr.mxu0 %v400
  %403 = vmatpush1.msra.mxu0 %v398
  %404 = vmatprep.subr.mxu0 0.0
  %405 = vmatpush1.msra.mxu0 0.0
  %406 = vmatprep.subr.mxu0 0.0
  %407 = vmatpush1.msra.mxu0 0.0
  %408 = vmatprep.subr.mxu0 0.0
  %409 = vmatpush1.msra.mxu0 0.0
  %410 = vmatprep.subr.mxu0 0.0
  %411 = vmatpush1.msra.mxu0 0.0
  %412 = vmatprep.subr.mxu0 0.0
  %413 = vmatpush1.msra.mxu0 0.0
  %414 = vmatprep.subr.mxu0 0.0
  %415 = vmatpush1.msra.mxu0 0.0
  %416 = vmatprep.subr.mxu0 0.0
  %417 = vmatpush1.msra.mxu0 0.0
  %418 = vmatprep.subr.mxu0 0.0
  %419 = vmatpush1.msra.mxu0 0.0
  %420 = vmatprep.subr.mxu0 0.0
  %421 = vmatpush1.msra.mxu0 0.0
  %422 = vmatprep.subr.mxu0 0.0
  %423 = vmatpush1.msra.mxu0 0.0
  %424 = vmatprep.subr.mxu0 0.0
  %425 = vmatpush1.msra.mxu0 0.0
  %426 = vmatprep.subr.mxu0 0.0
  %427 = vmatpush1.msra.mxu0 0.0
  %428 = vmatprep.subr.mxu0 0.0
  %429 = vmatpush1.msra.mxu0 0.0
  %430 = vmatprep.subr.mxu0 0.0
  %431 = vmatpush1.msra.mxu0 0.0
  %432 = vmatprep.subr.mxu0 0.0
  %433 = vmatpush1.msra.mxu0 0.0
  %434 = vmatprep.subr.mxu0 0.0
  %435 = vmatpush1.msra.mxu0 0.0
  %436 = vmatprep.subr.mxu0 0.0
  %437 = vmatpush1.msra.mxu0 0.0
  %438 = vmatprep.subr.mxu0 0.0
  %439 = vmatpush1.msra.mxu0 0.0
  %440 = vmatprep.subr.mxu0 0.0
  %441 = vmatpush1.msra.mxu0 0.0
  %442 = vmatprep.subr.mxu0 0.0
  %443 = vmatpush1.msra.mxu0 0.0
  %444 = vmatprep.subr.mxu0 0.0
  %445 = vmatpush1.msra.mxu0 0.0
  %446 = vmatprep.subr.mxu0 0.0
  %447 = vmatpush1.msra.mxu0 0.0
  %448 = vmatprep.subr.mxu0 0.0
  %449 = vmatpush1.msra.mxu0 0.0
  %450 = vmatprep.subr.mxu0 0.0
  %451 = vmatpush1.msra.mxu0 0.0
  %452 = vmatprep.subr.mxu0 0.0
  %453 = vmatpush1.msra.mxu0 0.0
  %454 = vmatprep.subr.mxu0 0.0
  %455 = vmatpush1.msra.mxu0 0.0
  %456 = vmatprep.subr.mxu0 0.0
  %457 = vmatpush1.msra.mxu0 0.0
  %458 = vmatprep.subr.mxu0 0.0
  %459 = vmatpush1.msra.mxu0 0.0
  %460 = vmatprep.subr.mxu0 0.0
  %461 = vmatpush1.msra.mxu0 0.0
  %462 = vmatprep.subr.mxu0 0.0
  %463 = vmatpush1.msra.mxu0 0.0
  %464 = vmatprep.subr.mxu0 0.0
  %465 = vmatpush1.msra.mxu0 0.0
  %466 = vmatprep.mubr.f32.mxu0 0.0
  %467 = vmatmul.mubr.f32.gmra.mrb[0].mxu0 %v36
  %v468 = vpop.f32.mrb[0].mxu0
  %v469 = vadd.f32 0.0, %v468
  %v470 = vpop.f32.mrb[0].mxu0
  %v471 = vadd.f32 0.0, %v470
  %472 = vmatprep.mubr.f32.mxu0 0.0
  %473 = vmatmul.mubr.f32.gmra.mrb[0].mxu0 %v39
  %v474 = vpop.f32.mrb[0].mxu0
  %v475 = vadd.f32 0.0, %v474
  %v476 = vpop.f32.mrb[0].mxu0
  %v477 = vadd.f32 0.0, %v476
  %478 = vdwg.mxu0
  %480 = vrot.lane.b32.xlu0 %v471, 17
  %v481 = vpop.permute.xlu0 %480
  %484 = vrot.lane.b32.xlu0 %v469, 17
  %v485 = vpop.permute.xlu0 %484
  %v486 = vsel %vm130, %v485, %v481
  %v489 = vsel %vm130, %v481, %v485
  %v490 = vsel %vm146, %v489, 0.0
  %v491 = vsel %vm147, %v486, 0.0
  %v494 = vrot.slane %v490, 4
  %v495 = vrot.slane %v491, 4
  %v498 = vadd.f32 %v469, %v494
  %v499 = vadd.f32 %v471, %v495
  %500 = vrot.lane.b32.xlu0 %v471, 16
  %v501 = vpop.permute.xlu0 %500
  %503 = vrot.lane.b32.xlu0 %v469, 16
  %v504 = vpop.permute.xlu0 %503
  %v505 = vsel %vm163, %v504, %v501
  %v508 = vsel %vm163, %v501, %v504
  %v509 = vsel %vm22, %v508, 0.0
  %v510 = vsel %vm23, %v505, 0.0
  %v513 = vrot.slane %v509, 5
  %v514 = vrot.slane %v510, 5
  %v517 = vadd.f32 %v498, %v513
  %v518 = vadd.f32 %v499, %v514
  %519 = vrot.lane.b32.xlu0 %v471, 15
  %v520 = vpop.permute.xlu0 %519
  %522 = vrot.lane.b32.xlu0 %v469, 15
  %v523 = vpop.permute.xlu0 %522
  %v524 = vsel %vm183, %v523, %v520
  %v526 = vsel %vm183, %v520, %v523
  %v528 = vrot.slane %v526, 2
  %v529 = vrot.slane %v524, 2
  %v532 = vsel %vm198, %v528, 0.0
  %v533 = vsel %vm199, %v529, 0.0
  %v536 = vrot.slane %v532, 4
  %v537 = vrot.slane %v533, 4
  %v540 = vadd.f32 %v517, %v536
  %v541 = vadd.f32 %v518, %v537
  %542 = vrot.lane.b32.xlu0 %v471, 1
  %v543 = vpop.permute.xlu0 %542
  %545 = vrot.lane.b32.xlu0 %v469, 1
  %v546 = vpop.permute.xlu0 %545
  %v547 = vsel %vm220, %v546, %v543
  %v549 = vsel %vm220, %v543, %v546
  %v551 = vcombine.low %v549, %v547
  %v553 = vunpack.c.l.s4 1966171168
  %v554 = vunpack.c.0.s8 %v553
  %v555 = vlaneseq
  %v556 = vshrl.u32 %v555, 7
  %v557 = vsub.s32 %v554, %v556
  %v558 = vrot.slane %v551, %v557
  %v559 = vcombine.high %v558, %v558
  %v561 = vunpack.c.l.s4 1966171168
  %v562 = vunpack.c.0.s8 %v561
  %v563 = vlaneseq
  %v564 = vshrl.u32 %v563, 7
  %v565 = vsub.s32 %v562, %v564
  %v566 = vrot.slane %v559, %v565
  %v567 = vcombine.high %v566, %v566
  %v569 = vsel %vm26, %v567, 0.0
  %v571 = vlaneseq
  %v572 = vshrl.u32 %v571, 7
  %v573 = vsub.s32 0, %v572
  %v574 = vrot.slane %v569, %v573
  %v575 = vlaneseq
  %v576 = vshrl.u32 %v575, 7
  %v577 = vsub.s32 1, %v576
  %v578 = vrot.slane %v569, %v577
  %v581 = vadd.f32 %v540, %v574
  %v582 = vadd.f32 %v541, %v578
  %583 = vrot.lane.b32.xlu0 %v469, 127
  %v584 = vpop.permute.xlu0 %583
  %585 = vrot.lane.b32.xlu0 %v471, 127
  %v586 = vpop.permute.xlu0 %585
  %v587 = vsel %vm261, %v584, %v586
  %v590 = vsel %vm261, %v586, %v584
  %v592 = vcombine.high %v587, %v590
  %v594 = vunpack.c.l.s4 1966171168
  %v595 = vunpack.c.0.s8 %v594
  %v596 = vlaneseq
  %v597 = vshrl.u32 %v596, 7
  %v598 = vsub.s32 %v595, %v597
  %v599 = vrot.slane %v592, %v598
  %v600 = vcombine.high %v599, %v599
  %v602 = vunpack.c.l.s4 1966171168
  %v603 = vunpack.c.0.s8 %v602
  %v604 = vlaneseq
  %v605 = vshrl.u32 %v604, 7
  %v606 = vsub.s32 %v603, %v605
  %v607 = vrot.slane %v600, %v606
  %v609 = vsel %vm27, %v607, 0.0
  %v611 = vlaneseq
  %v612 = vshrl.u32 %v611, 7
  %v613 = vsub.s32 0, %v612
  %v614 = vrot.slane %v609, %v613
  %v615 = vlaneseq
  %v616 = vshrl.u32 %v615, 7
  %v617 = vsub.s32 1, %v616
  %v618 = vrot.slane %v609, %v617
  %v621 = vadd.f32 %v581, %v614
  %v622 = vadd.f32 %v582, %v618
  %623 = vrot.lane.b32.xlu0 %v469, 113
  %v624 = vpop.permute.xlu0 %623
  %625 = vrot.lane.b32.xlu0 %v471, 113
  %v626 = vpop.permute.xlu0 %625
  %v627 = vsel %vm302, %v624, %v626
  %v630 = vsel %vm302, %v626, %v624
  %v632 = vrot.slane %v627, 6
  %v633 = vrot.slane %v630, 6
  %v636 = vsel %vm307, %v632, 0.0
  %v637 = vsel %vm308, %v633, 0.0
  %v640 = vrot.slane %v636, 4
  %v641 = vrot.slane %v637, 4
  %v644 = vadd.f32 %v621, %v640
  %v645 = vadd.f32 %v622, %v641
  %646 = vrot.lane.b32.xlu0 %v469, 112
  %v647 = vpop.permute.xlu0 %646
  %648 = vrot.lane.b32.xlu0 %v471, 112
  %v649 = vpop.permute.xlu0 %648
  %v650 = vsel %vm328, %v647, %v649
  %v654 = vsel %vm328, %v649, %v647
  %v655 = vsel %vm24, %v650, 0.0
  %v656 = vsel %vm25, %v654, 0.0
  %v659 = vrot.slane %v655, 3
  %v660 = vrot.slane %v656, 3
  %v663 = vadd.f32 %v644, %v659
  %v664 = vadd.f32 %v645, %v660
  %667 = vrot.lane.b32.xlu0 %v475, 111
  %v668 = vpop.permute.xlu0 %667
  %669 = vrot.lane.b32.xlu0 %v477, 111
  %v670 = vpop.permute.xlu0 %669
  %v671 = vsel %vm350, %v668, %v670
  %v675 = vsel %vm350, %v670, %v668
  %v676 = vsel %vm356, %v671, 0.0
  %v677 = vsel %vm357, %v675, 0.0
  %v680 = vrot.slane %v676, 4
  %v681 = vrot.slane %v677, 4
  %v684 = vadd.f32 %v663, %v680
  %v685 = vadd.f32 %v664, %v681
  %v686 = vadd.f32 %v684, %v368
  %v687 = vadd.f32 %v685, %v368
  %v690 = vcombine.high %v686, %v687
  %v692 = vunpack.c.l.s4 1966171168
  %v693 = vunpack.c.0.s8 %v692
  %v694 = vlaneseq
  %v695 = vshrl.u32 %v694, 7
  %v696 = vsub.s32 %v693, %v695
  %v697 = vrot.slane %v690, %v696
  %v699 = vunpack.c.l.s4 1966171168
  %v700 = vunpack.c.0.s8 %v699
  %v701 = vlaneseq
  %v702 = vshrl.u32 %v701, 7
  %v703 = vsub.s32 %v700, %v702
  %v704 = vrot.slane %v697, %v703
  %s706 = scalar_lea.vmem %s4, 2
  %707 = vst.msk [vmem:[%s706] sm:$0x3] %vm392, %v704
  // Predicated region
  $region18: #{cls_pred_head_forward.1} parent=0 // pred_check
    _
  $region19: #{cls_pred_head_forward.1} parent=0 // pred_check_branch
    %709 = sbr.rel (0) target = $region21
  $region20: #{cls_pred_head_forward.1} parent=0 // pred_region
    _
  $region21: #{cls_pred_head_forward.1} parent=0 // pred_fallthru
    _
  // Predicated region
  $region22: #{cls_pred_head_forward.1} parent=0 // pred_check
    _
  $region23: #{cls_pred_head_forward.1} parent=0 // pred_check_branch
    %711 = sbr.rel (0) target = $region25
  $region24: #{cls_pred_head_forward.1} parent=0 // pred_region
    _
  $region25: #{cls_pred_head_forward.1} parent=0 // pred_fallthru
    _

</llo_original>
